<compile_context>
chip_gen: v7x
topology: tpu7x:2x2x1
jax: 0.10.0
libtpu: 0.0.40
codegen_flags: <defaults>
</compile_context>

<pallas_src>
import functools

import jax
import jax.numpy as jnp
from jax.experimental import pallas as pl
from jax.experimental.pallas import tpu as pltpu


def _round_up(x, m):
    return ((x + m - 1) // m) * m


def _ct_ce_kernel(logits_ref, lbl_col_ref, ct_pad_ref, ct_col_ref, out_ref,
                  row_scr, g_scr, *,
                  t_pad, rb_size, n_rb, w_band, m_pad, m_win,
                  ignore_index, pad_id, logit_clip, v_total, tail,
                  input_is_bf16, hi_lo):
    v = pl.program_id(1)
    nv = pl.num_programs(1)
    S, Vt = logits_ref.shape
    v_off = v * Vt

    @pl.when(v == 0)
    def _init():
        # lane 0 = running max (-inf), lane 1 = running sum(exp) (0), lane 2 = picked (0)
        lane3 = jax.lax.broadcasted_iota(jnp.int32, row_scr.shape, 1)
        row_scr[...] = jnp.where(lane3 == 0, -jnp.inf, 0.0)
        g_scr[...] = jnp.zeros_like(g_scr)

    x = logits_ref[...].astype(jnp.float32)                  # (S, Vt) f32
    col_row = jax.lax.broadcasted_iota(jnp.int32, (1, Vt), 1)
    if tail:
        # Masked last vocab tile: columns with global index >= V hold garbage.
        x = jnp.where(col_row < (v_total - v_off), x, -jnp.inf)

    lbl_c = lbl_col_ref[...]                                 # (S, 1) int32

    # ---------- cross entropy: online logsumexp + fused target-logit gather ---
    # NOTE: labels outside [0, V) (other than ignore_index) contribute 0 to the
    # picked logit (documented contract; PyTorch would raise/clamp instead).
    match = col_row == (lbl_c - v_off)                       # (S, Vt)
    m_old = row_scr[:, 0:1]
    l_old = row_scr[:, 1:2]
    tile_max = jnp.max(x, axis=-1, keepdims=True)
    m_new = jnp.maximum(m_old, tile_max)
    row_scr[:, 0:1] = m_new
    row_scr[:, 1:2] = (l_old * jnp.exp(m_old - m_new)
                       + jnp.sum(jnp.exp(x - m_new), axis=-1, keepdims=True))
    row_scr[:, 2:3] += jnp.sum(jnp.where(match, x, 0.0), axis=-1, keepdims=True)

    # ---------- contrastive token: banded MXU one-hot gather -------------------
    if input_is_bf16 and not tail:
        # bf16 fast path: clip directly on the ref slice (exact, stays bf16).
        xc_hi = jnp.clip(logits_ref[0:t_pad, :], -logit_clip, logit_clip)
        xc_lo = None
    else:
        xc_f32 = jnp.clip(x[0:t_pad, :], -logit_clip, logit_clip)
        xc_hi = xc_f32.astype(jnp.bfloat16)
        xc_lo = ((xc_f32 - xc_hi.astype(jnp.float32)).astype(jnp.bfloat16)
                 if hi_lo else None)

    # One-hot over the (left-padded) target axis, built once per vocab tile and
    # sliced per row block (aligned slices when Rb / W are 128-multiples).
    tgt_rel = ct_pad_ref[...] - v_off                        # (1, L) int32
    voc_iota = jax.lax.broadcasted_iota(jnp.int32, (Vt, 1), 0)
    onehot = (voc_iota == tgt_rel).astype(jnp.bfloat16)      # (Vt, L) exact 0/1

    for r in range(n_rb):
        r0 = r * rb_size
        oh = onehot[:, r0:r0 + w_band]                       # (Vt, W)
        upd = jnp.dot(xc_hi[r0:r0 + rb_size, :], oh,
                      preferred_element_type=jnp.float32)
        if xc_lo is not None:
            upd = upd + jnp.dot(xc_lo[r0:r0 + rb_size, :], oh,
                                preferred_element_type=jnp.float32)
        g_scr[r0:r0 + rb_size, :] += upd

    # ---------- finalize on the last vocab tile --------------------------------
    @pl.when(v == nv - 1)
    def _finalize():
        m_f = row_scr[:, 0:1]
        l_f = row_scr[:, 1:2]
        picked = row_scr[:, 2:3]
        lse = m_f + jnp.log(l_f)
        valid = lbl_c != ignore_index
        ce_num = jnp.sum(jnp.where(valid, lse - picked, 0.0))
        ce_cnt = jnp.sum(valid.astype(jnp.float32))

        # Banded coordinates: band column w of row i (i_local = i mod Rb) maps
        # to target index j = i + (w - i_local) - m_pad.
        d_io = (jax.lax.broadcasted_iota(jnp.int32, (rb_size, w_band), 1)
                - jax.lax.broadcasted_iota(jnp.int32, (rb_size, w_band), 0))
        is_diag = d_io == m_pad                       # j == i (positive score)
        in_window = (d_io >= m_pad - m_win) & (d_io <= m_pad - 1)   # i-M <= j <= i-1

        ct_num = 0.0
        ct_cnt = 0.0
        for r in range(n_rb):
            r0 = r * rb_size
            Gb = g_scr[r0:r0 + rb_size, :]                   # (Rb, W)
            band_t = ct_pad_ref[:, r0:r0 + w_band]           # (1, W) target at column j
            trow = ct_col_ref[r0:r0 + rb_size, :]            # (Rb, 1) row's own target
            pos = jnp.sum(jnp.where(is_diag, Gb, 0.0), axis=-1, keepdims=True)
            valid_neg = in_window & (band_t != pad_id) & (band_t != trow)
            sum_exp = jnp.sum(jnp.where(valid_neg, jnp.exp(Gb - pos), 0.0),
                              axis=-1, keepdims=True)
            non_pad = trow != pad_id
            ct_num = ct_num + jnp.sum(jnp.where(non_pad, jnp.log(1.0 + sum_exp), 0.0))
            ct_cnt = ct_cnt + jnp.sum(non_pad.astype(jnp.float32))

        lane = jax.lax.broadcasted_iota(jnp.int32, (1, 1, 128), 2)
        out_ref[...] = (jnp.where(lane == 0, ce_num, 0.0)
                        + jnp.where(lane == 1, ce_cnt, 0.0)
                        + jnp.where(lane == 2, ct_num, 0.0)
                        + jnp.where(lane == 3, ct_cnt, 0.0))


def _vmem_capacity_bytes():
    try:
        return int(pltpu.get_tpu_info().vmem_capacity_bytes)
    except Exception:
        return 64 * 1024 * 1024   # safe default (v7x physical per-core VMEM)


def _pick_row_block(t_pad):
    """Row-block size for the banded G accumulation (must divide t_pad)."""
    if t_pad <= 256:
        return t_pad
    for c in (128, 256):
        if t_pad % c == 0:
            return c
    for c in range(64, t_pad):
        if t_pad % c == 0:
            return c
    return t_pad


def _pick_v_tile(V, est_fn, budget_bytes, min_tile):
    """Largest lane-aligned vocab tile whose full working set fits the budget."""
    cands = []
    if V % 128 == 0 or V <= 128:
        cands.append(V)
    cands.extend(c for c in (8192, 4096, 2048, 1024, 512, 256, 128) if c < V)
    feasible = [c for c in cands if est_fn(c) <= budget_bytes]
    if feasible:
        return max(feasible)
    # Nothing fits the soft budget: keep per-row DMA runs long anyway.
    # TODO(synk): add an S-block grid axis instead of shrinking v_tile further.
    return min(min_tile, V)


def contrastive_token_loss_tpu(logits, labels, *, ignore_index=-100, pad_id=0,
                               ct_length=0.25, preced_m_negatives=0.5,
                               v_tile=None, ct_single_pass=False):
    """CE(mean, ignore_index=-100) + CT loss computed by one Pallas TPU kernel.

    NOTE: like the PyTorch reference, the result is undefined if every label is
    ignore_index (CE) or every CT target equals pad_id (CT).
    """
    B, S, V = logits.shape
    labels = labels.astype(jnp.int32)

    # Static config resolution (mirrors the PyTorch reference exactly).
    # TODO(synk): ct_length <= 0 (CE-only) fast path is not implemented.
    assert ct_length > 0, "ct_length must be > 0"
    T = round(S * ct_length) if ct_length <= 1 else round(ct_length)
    assert 0 < T <= S, "ct_length must resolve to a positive length <= S"
    assert preced_m_negatives > 0, "preced_m_negatives must be > 0"
    M = (round(preced_m_negatives * T) if preced_m_negatives <= 1
         else round(preced_m_negatives))

    # CT window padded to a sublane/lane friendly static size; padded rows hold
    # pad_id targets and never contribute.
    align = 128 if T >= 128 else 8
    T_pad = min(_round_up(T, align), S)

    # Banded G layout.
    rb_size = _pick_row_block(T_pad)
    n_rb = T_pad // rb_size
    assert n_rb * rb_size == T_pad
    m_win = min(M, T_pad)
    m_need = min(m_win, T_pad - rb_size)
    w_raw = rb_size + m_need
    w_band = _round_up(w_raw, 128 if w_raw >= 128 else 8)
    m_pad = w_band - rb_size
    L = m_pad + T_pad

    input_is_bf16 = jnp.dtype(logits.dtype) == jnp.dtype(jnp.bfloat16)
    hi_lo = (not input_is_bf16) and (not ct_single_pass)
    itemsize = jnp.dtype(logits.dtype).itemsize

    cap = _vmem_capacity_bytes()

    def est_vmem(vt):
        vt_l = _round_up(vt, 128)
        s8 = _round_up(S, 8)
        t8 = _round_up(T_pad, 8)
        b = 2 * S * vt_l * itemsize                 # double-buffered logits stream
        b += 2 * S * vt_l * 4                       # f32 cast + one elementwise temp
        b += 2 * s8 * 128 * 4                       # labels (S,1) int32 (lane padded, x2)
        b += s8 * 128 * 4                           # packed (S,3) m/l/picked scratch
        b += t8 * _round_up(w_band, 128) * 4        # banded G accumulator
        b += 2 * 8 * _round_up(L, 128) * 4          # padded CT targets (1,L), x2
        b += 2 * t8 * 128 * 4                       # CT targets column (T_pad,1), x2
        b += vt_l * _round_up(L, 128) * 2 * 2       # bf16 one-hot + compare temp
        b += t8 * vt_l * (4 + (4 if hi_lo else 2))  # clipped f32 + hi(+lo) operands
        b += 2 * (1 << 20)                          # headroom
        return b

    if v_tile is None:
        v_tile = _pick_v_tile(V, est_vmem, budget_bytes=int(0.70 * cap),
                              min_tile=(512 if itemsize <= 2 else 256))
    assert v_tile == V or v_tile % 128 == 0
    n_v = pl.cdiv(V, v_tile)
    tail = V % v_tile                      # nonzero -> masked last vocab tile
    est = est_vmem(v_tile)
    vmem_limit = int(min(int(0.85 * cap), max(int(1.3 * est), 32 * 1024 * 1024)))

    # Small int32 side inputs; logits are streamed in their native dtype.
    lbl_col = labels.reshape(B, S, 1)
    tgt = labels[:, :T]
    tgt = jnp.where(tgt == ignore_index, pad_id, tgt)
    tgt = jnp.pad(tgt, ((0, 0), (0, T_pad - T)), constant_values=pad_id)
    ct_col = tgt.reshape(B, T_pad, 1)
    ct_pad = jnp.pad(tgt, ((0, 0), (m_pad, 0)),
                     constant_values=pad_id).reshape(B, 1, L)

    kernel = functools.partial(
        _ct_ce_kernel, t_pad=T_pad, rb_size=rb_size, n_rb=n_rb, w_band=w_band,
        m_pad=m_pad, m_win=m_win, ignore_index=ignore_index, pad_id=pad_id,
        logit_clip=10.0, v_total=V, tail=tail,
        input_is_bf16=input_is_bf16, hi_lo=hi_lo)

    out = pl.pallas_call(
        kernel,
        out_shape=jax.ShapeDtypeStruct((B, 1, 128), jnp.float32),
        grid_spec=pltpu.PrefetchScalarGridSpec(
            num_scalar_prefetch=0,
            grid=(B, n_v),
            in_specs=[
                pl.BlockSpec((None, S, v_tile), lambda b, v: (b, 0, v)),
                pl.BlockSpec((None, S, 1), lambda b, v: (b, 0, 0)),
                pl.BlockSpec((None, 1, L), lambda b, v: (b, 0, 0)),
                pl.BlockSpec((None, T_pad, 1), lambda b, v: (b, 0, 0)),
            ],
            out_specs=pl.BlockSpec((1, 1, 128), lambda b, v: (b, 0, 0)),
            scratch_shapes=[
                pltpu.VMEM((S, 3), jnp.float32),        # packed m / l / picked
                pltpu.VMEM((T_pad, w_band), jnp.float32),  # banded G accumulator
            ],
        ),
        compiler_params=pltpu.CompilerParams(
            # Per-batch outputs => batch axis carries no cross-iteration state;
            # vocab axis is the reduction.  TODO(synk): for B == 1 split the
            # vocab reduction across the two v7x TensorCores instead.
            dimension_semantics=("parallel", "arbitrary"),
            vmem_limit_bytes=vmem_limit),
    )(logits, lbl_col, ct_pad, ct_col)

    ce_num = jnp.sum(out[:, 0, 0])
    ce_cnt = jnp.sum(out[:, 0, 1])
    ct_num = jnp.sum(out[:, 0, 2])
    ct_cnt = jnp.sum(out[:, 0, 3])
    return ce_num / ce_cnt + ct_num / ct_cnt


def _reference_loss(logits, labels, *, ignore_index=-100, pad_id=0,
                    ct_length=0.25, preced_m_negatives=0.5):
    """Pure-JAX port of the PyTorch module, used only for a sanity check."""
    logits = logits.astype(jnp.float32)
    B, S, V = logits.shape
    # cross entropy
    valid = labels != ignore_index
    lse = jax.scipy.special.logsumexp(logits, axis=-1)
    safe_lbl = jnp.where(valid, labels, 0)
    picked = jnp.take_along_axis(logits, safe_lbl[..., None], axis=-1)[..., 0]
    ce = jnp.sum(jnp.where(valid, lse - picked, 0.0)) / jnp.sum(valid)
    # contrastive token loss
    T = round(S * ct_length) if ct_length <= 1 else round(ct_length)
    M = round(preced_m_negatives * T) if preced_m_negatives <= 1 else round(preced_m_negatives)
    xc = jnp.clip(logits, -10.0, 10.0)
    tgt = labels[:, :T]
    tgt = jnp.where(tgt == ignore_index, pad_id, tgt)
    non_pad = tgt != pad_id
    preced = jnp.broadcast_to(tgt[:, None, :], (B, T, T))
    i = jnp.arange(T)[:, None]
    j = jnp.arange(T)[None, :]
    window = (j < i) & (j >= i - M)
    preced = jnp.where(window[None], preced, pad_id)
    preced = jnp.where(preced == tgt[:, :, None], pad_id, preced)
    pos = jnp.take_along_axis(xc[:, :T, :], tgt[..., None], axis=-1)
    neg = jnp.take_along_axis(xc[:, :T, :], preced, axis=-1)
    sum_exp = jnp.sum(jnp.exp(neg - pos) * (preced != pad_id), axis=-1)
    losses = jnp.log(1.0 + sum_exp) * non_pad
    ct = jnp.sum(losses) / jnp.sum(non_pad)
    return ce + ct


if __name__ == "__main__":
    key = jax.random.PRNGKey(0)
    B, S, V = 2, 32, 384
    k1, k2, k3, k4 = jax.random.split(key, 4)

    # bf16 logits streamed from HBM (kernel casts to f32 per tile).
    logits = (jax.random.normal(k1, (B, S, V), dtype=jnp.float32)
              * 3.0).astype(jnp.bfloat16)
    labels = jax.random.randint(k2, (B, S), 0, V, dtype=jnp.int32)
    # exercise ignore_index and pad_id handling inside/outside the CT window
    labels = labels.at[0, 5].set(-100)   # ignore_index inside CT window
    labels = labels.at[1, 2].set(-100)
    labels = labels.at[0, 1].set(0)      # pad_id inside CT window
    labels = labels.at[1, 20].set(0)     # pad_id outside CT window

    ref = _reference_loss(logits, labels)
    loss_tiled = contrastive_token_loss_tpu(logits, labels, v_tile=128)  # 3 vocab tiles
    loss_auto = contrastive_token_loss_tpu(logits, labels)               # auto tile

    # f32 logits + ragged vocab (masked last tile) exercising the hi/lo path.
    V2 = 200
    logits2 = jax.random.normal(k3, (B, S, V2), dtype=jnp.float32) * 3.0
    labels2 = jax.random.randint(k4, (B, S), 0, V2, dtype=jnp.int32)
    labels2 = labels2.at[0, 3].set(-100)
    labels2 = labels2.at[1, 0].set(0)
    ref2 = _reference_loss(logits2, labels2)
    loss_ragged = contrastive_token_loss_tpu(logits2, labels2, v_tile=128)

    jax.block_until_ready((loss_tiled, loss_auto, loss_ragged))

    checks = (("tiled", loss_tiled, ref),
              ("auto", loss_auto, ref),
              ("ragged_f32", loss_ragged, ref2))
    for name, got, want in checks:
        err = abs(float(got) - float(want))
        assert err <= 5e-3 * max(1.0, abs(float(want))), (name, float(got), float(want))
    print("KERNEL_OK")
</pallas_src>

<mosaic_0001>
module attributes {stable_mosaic.version = 11 : i64} {
  func.func @_ct_ce_kernel(%arg0: i32, %arg1: i32, %arg2: memref<1x32x128xbf16, #tpu.memory_space<vmem>>, %arg3: memref<1x32x1xi32, #tpu.memory_space<vmem>>, %arg4: memref<1x1x8xi32, #tpu.memory_space<vmem>>, %arg5: memref<1x8x1xi32, #tpu.memory_space<vmem>>, %arg6: memref<1x1x128xf32, #tpu.memory_space<vmem>>, %arg7: memref<32x3xf32, #tpu.memory_space<vmem>>, %arg8: memref<8x8xf32, #tpu.memory_space<vmem>>) attributes {dimension_semantics = [#tpu.dimension_semantics<parallel>, #tpu.dimension_semantics<arbitrary>], iteration_bounds = array<i64: 2, 3>, scalar_prefetch = 0 : i64, scratch_operands = 2 : i64, tpu.core_type = #tpu.core_type<tc>, window_params = [{transform_indices = @transform_0, window_bounds = array<i64: 1, 32, 128>}, {transform_indices = @transform_1, window_bounds = array<i64: 1, 32, 1>}, {transform_indices = @transform_2, window_bounds = array<i64: 1, 1, 8>}, {transform_indices = @transform_3, window_bounds = array<i64: 1, 8, 1>}, {transform_indices = @transform_4, window_bounds = array<i64: 1, 1, 128>}]} {
    %c128_i32 = arith.constant 128 : i32
    %0 = arith.muli %arg1, %c128_i32 : i32
    %c0_i32 = arith.constant 0 : i32
    %1 = arith.cmpi eq, %arg1, %c0_i32 : i32
    %2 = arith.extui %1 : i1 to i32
    %c0_i32_0 = arith.constant 0 : i32
    %3 = arith.cmpi ne, %2, %c0_i32_0 : i32
    scf.if %3 {
      %64 = tpu.iota {dimensions = array<i32: 1>} : vector<32x3xi32>
      %c0_i32_33 = arith.constant 0 : i32
      %65 = vector.broadcast %c0_i32_33 : i32 to vector<32x3xi32>
      %66 = arith.cmpi eq, %64, %65 : vector<32x3xi32>
      %cst_34 = arith.constant 0xFF800000 : f32
      %cst_35 = arith.constant 0.000000e+00 : f32
      %67 = vector.broadcast %cst_34 : f32 to vector<32x3xf32>
      %68 = vector.broadcast %cst_35 : f32 to vector<32x3xf32>
      %69 = arith.select %66, %67, %68 : vector<32x3xi1>, vector<32x3xf32>
      %c0_36 = arith.constant 0 : index
      %c0_37 = arith.constant 0 : index
      %70 = vector.load %arg7[%c0_36, %c0_37] : memref<32x3xf32, #tpu.memory_space<vmem>>, vector<32x3xf32>
      tpu.vector_store %arg7[%c0_36, %c0_37], %69 {strides = array<i32>} : memref<32x3xf32, #tpu.memory_space<vmem>>, vector<32x3xf32>,
      %cst_38 = arith.constant 0.000000e+00 : f32
      %71 = vector.broadcast %cst_38 : f32 to vector<8x8xf32>
      %c0_39 = arith.constant 0 : index
      %c0_40 = arith.constant 0 : index
      %72 = vector.load %arg8[%c0_39, %c0_40] : memref<8x8xf32, #tpu.memory_space<vmem>>, vector<8x8xf32>
      tpu.vector_store %arg8[%c0_39, %c0_40], %71 {strides = array<i32>} : memref<8x8xf32, #tpu.memory_space<vmem>>, vector<8x8xf32>,
    } else {
    }
    %c0 = arith.constant 0 : index
    %c0_1 = arith.constant 0 : index
    %c0_2 = arith.constant 0 : index
    %4 = vector.load %arg2[%c0, %c0_1, %c0_2] : memref<1x32x128xbf16, #tpu.memory_space<vmem>>, vector<1x32x128xbf16>
    %5 = vector.shape_cast %4 : vector<1x32x128xbf16> to vector<32x128xbf16>
    %6 = arith.extf %5 : vector<32x128xbf16> to vector<32x128xf32>
    %7 = tpu.iota {dimensions = array<i32: 1>} : vector<1x128xi32>
    %c0_3 = arith.constant 0 : index
    %c0_4 = arith.constant 0 : index
    %c0_5 = arith.constant 0 : index
    %8 = vector.load %arg3[%c0_3, %c0_4, %c0_5] : memref<1x32x1xi32, #tpu.memory_space<vmem>>, vector<1x32x1xi32>
    %9 = vector.shape_cast %8 : vector<1x32x1xi32> to vector<32x1xi32>
    %10 = vector.broadcast %0 : i32 to vector<32x1xi32>
    %11 = arith.subi %9, %10 : vector<32x1xi32>
    %12 = vector.broadcast %7 : vector<1x128xi32> to vector<32x128xi32>
    %13 = vector.broadcast %11 : vector<32x1xi32> to vector<32x128xi32>
    %14 = arith.cmpi eq, %12, %13 : vector<32x128xi32>
    %c0_6 = arith.constant 0 : index
    %c0_7 = arith.constant 0 : index
    %15 = vector.load %arg7[%c0_6, %c0_7] : memref<32x3xf32, #tpu.memory_space<vmem>>, vector<32x1xf32>
    %c0_8 = arith.constant 0 : index
    %c1 = arith.constant 1 : index
    %16 = vector.load %arg7[%c0_8, %c1] : memref<32x3xf32, #tpu.memory_space<vmem>>, vector<32x1xf32>
    %cst = arith.constant dense<0xFF800000> : vector<32xf32>
    %17 = vector.multi_reduction <maximumf>, %6, %cst [1] : vector<32x128xf32> to vector<32xf32>
    %18 = vector.shape_cast %17 : vector<32xf32> to vector<32x1xf32>
    %19 = arith.maximumf %15, %18 : vector<32x1xf32>
    %c0_9 = arith.constant 0 : index
    %c0_10 = arith.constant 0 : index
    %20 = vector.load %arg7[%c0_9, %c0_10] : memref<32x3xf32, #tpu.memory_space<vmem>>, vector<32x1xf32>
    tpu.vector_store %arg7[%c0_9, %c0_10], %19 {strides = array<i32>} : memref<32x3xf32, #tpu.memory_space<vmem>>, vector<32x1xf32>,
    %21 = arith.subf %15, %19 : vector<32x1xf32>
    %22 = math.exp %21 : vector<32x1xf32>
    %23 = arith.mulf %16, %22 : vector<32x1xf32>
    %24 = vector.broadcast %19 : vector<32x1xf32> to vector<32x128xf32>
    %25 = arith.subf %6, %24 : vector<32x128xf32>
    %26 = math.exp %25 : vector<32x128xf32>
    %cst_11 = arith.constant dense<0.000000e+00> : vector<32xf32>
    %27 = vector.multi_reduction <add>, %26, %cst_11 [1] : vector<32x128xf32> to vector<32xf32>
    %28 = vector.shape_cast %27 : vector<32xf32> to vector<32x1xf32>
    %29 = arith.addf %23, %28 : vector<32x1xf32>
    %c0_12 = arith.constant 0 : index
    %c1_13 = arith.constant 1 : index
    %30 = vector.load %arg7[%c0_12, %c1_13] : memref<32x3xf32, #tpu.memory_space<vmem>>, vector<32x1xf32>
    tpu.vector_store %arg7[%c0_12, %c1_13], %29 {strides = array<i32>} : memref<32x3xf32, #tpu.memory_space<vmem>>, vector<32x1xf32>,
    %c0_14 = arith.constant 0 : index
    %c2 = arith.constant 2 : index
    %31 = vector.load %arg7[%c0_14, %c2] : memref<32x3xf32, #tpu.memory_space<vmem>>, vector<32x1xf32>
    %cst_15 = arith.constant 0.000000e+00 : f32
    %32 = vector.broadcast %cst_15 : f32 to vector<32x128xf32>
    %33 = arith.select %14, %6, %32 : vector<32x128xi1>, vector<32x128xf32>
    %cst_16 = arith.constant dense<0.000000e+00> : vector<32xf32>
    %34 = vector.multi_reduction <add>, %33, %cst_16 [1] : vector<32x128xf32> to vector<32xf32>
    %35 = vector.shape_cast %34 : vector<32xf32> to vector<32x1xf32>
    %36 = arith.addf %31, %35 : vector<32x1xf32>
    %c0_17 = arith.constant 0 : index
    %c2_18 = arith.constant 2 : index
    %37 = vector.load %arg7[%c0_17, %c2_18] : memref<32x3xf32, #tpu.memory_space<vmem>>, vector<32x1xf32>
    tpu.vector_store %arg7[%c0_17, %c2_18], %36 {strides = array<i32>} : memref<32x3xf32, #tpu.memory_space<vmem>>, vector<32x1xf32>,
    %c0_19 = arith.constant 0 : index
    %c0_20 = arith.constant 0 : index
    %c0_21 = arith.constant 0 : index
    %38 = vector.load %arg2[%c0_19, %c0_20, %c0_21] : memref<1x32x128xbf16, #tpu.memory_space<vmem>>, vector<1x8x128xbf16>
    %39 = vector.shape_cast %38 : vector<1x8x128xbf16> to vector<8x128xbf16>
    %cst_22 = arith.constant -1.000000e+01 : f32
    %cst_23 = arith.constant 1.000000e+01 : f32
    %40 = arith.truncf %cst_22 : f32 to bf16
    %41 = vector.broadcast %40 : bf16 to vector<8x128xbf16>
    %42 = arith.maximumf %41, %39 : vector<8x128xbf16>
    %43 = arith.truncf %cst_23 : f32 to bf16
    %44 = vector.broadcast %43 : bf16 to vector<8x128xbf16>
    %45 = arith.minimumf %44, %42 : vector<8x128xbf16>
    %c0_24 = arith.constant 0 : index
    %c0_25 = arith.constant 0 : index
    %c0_26 = arith.constant 0 : index
    %46 = vector.load %arg4[%c0_24, %c0_25, %c0_26] : memref<1x1x8xi32, #tpu.memory_space<vmem>>, vector<1x1x8xi32>
    %47 = vector.shape_cast %46 : vector<1x1x8xi32> to vector<1x8xi32>
    %48 = vector.broadcast %0 : i32 to vector<1x8xi32>
    %49 = arith.subi %47, %48 : vector<1x8xi32>
    %50 = tpu.iota {dimensions = array<i32: 0>} : vector<128x1xi32>
    %51 = vector.broadcast %50 : vector<128x1xi32> to vector<128x8xi32>
    %52 = vector.broadcast %49 : vector<1x8xi32> to vector<128x8xi32>
    %53 = arith.cmpi eq, %51, %52 : vector<128x8xi32>
    %54 = arith.extui %53 : vector<128x8xi1> to vector<128x8xi32>
    %55 = arith.sitofp %54 : vector<128x8xi32> to vector<128x8xf32>
    %56 = arith.truncf %55 : vector<128x8xf32> to vector<128x8xbf16>
    %cst_27 = arith.constant dense<0.000000e+00> : vector<8x8xf32>
    %57 = tpu.matmul %45, %56, %cst_27 {dimension_numbers = #tpu.dot_dimension_numbers<[1], [0], [0], [1], [0, 0, 1, 1], [], []>} : vector<8x128xbf16>, vector<128x8xbf16>, vector<8x8xf32> -> vector<8x8xf32>
    %c0_28 = arith.constant 0 : index
    %c0_29 = arith.constant 0 : index
    %58 = vector.load %arg8[%c0_28, %c0_29] : memref<8x8xf32, #tpu.memory_space<vmem>>, vector<8x8xf32>
    %59 = arith.addf %58, %57 : vector<8x8xf32>
    %c0_30 = arith.constant 0 : index
    %c0_31 = arith.constant 0 : index
    %60 = vector.load %arg8[%c0_30, %c0_31] : memref<8x8xf32, #tpu.memory_space<vmem>>, vector<8x8xf32>
    tpu.vector_store %arg8[%c0_30, %c0_31], %59 {strides = array<i32>} : memref<8x8xf32, #tpu.memory_space<vmem>>, vector<8x8xf32>,
    %c2_i32 = arith.constant 2 : i32
    %61 = arith.cmpi eq, %arg1, %c2_i32 : i32
    %62 = arith.extui %61 : i1 to i32
    %c0_i32_32 = arith.constant 0 : i32
    %63 = arith.cmpi ne, %62, %c0_i32_32 : i32
    scf.if %63 {
      %c0_33 = arith.constant 0 : index
      %c0_34 = arith.constant 0 : index
      %64 = vector.load %arg7[%c0_33, %c0_34] : memref<32x3xf32, #tpu.memory_space<vmem>>, vector<32x1xf32>
      %c0_35 = arith.constant 0 : index
      %c1_36 = arith.constant 1 : index
      %65 = vector.load %arg7[%c0_35, %c1_36] : memref<32x3xf32, #tpu.memory_space<vmem>>, vector<32x1xf32>
      %c0_37 = arith.constant 0 : index
      %c2_38 = arith.constant 2 : index
      %66 = vector.load %arg7[%c0_37, %c2_38] : memref<32x3xf32, #tpu.memory_space<vmem>>, vector<32x1xf32>
      %67 = math.log %65 : vector<32x1xf32>
      %68 = arith.addf %64, %67 : vector<32x1xf32>
      %c-100_i32 = arith.constant -100 : i32
      %69 = vector.broadcast %c-100_i32 : i32 to vector<32x1xi32>
      %70 = arith.cmpi ne, %9, %69 : vector<32x1xi32>
      %71 = arith.subf %68, %66 : vector<32x1xf32>
      %cst_39 = arith.constant 0.000000e+00 : f32
      %72 = vector.broadcast %cst_39 : f32 to vector<32x1xf32>
      %73 = arith.select %70, %71, %72 : vector<32x1xi1>, vector<32x1xf32>
      %74 = vector.shape_cast %73 : vector<32x1xf32> to vector<1x32x1xf32>
      %cst_40 = arith.constant dense<0.000000e+00> : vector<1xf32>
      %75 = vector.multi_reduction <add>, %74, %cst_40 [1, 2] : vector<1x32x1xf32> to vector<1xf32>
      %76 = vector.shape_cast %75 : vector<1xf32> to vector<1x1x1xf32>
      %77 = vector.extract %76[0, 0, 0] : f32 from vector<1x1x1xf32>
      %78 = arith.extui %70 : vector<32x1xi1> to vector<32x1xi32>
      %79 = arith.sitofp %78 : vector<32x1xi32> to vector<32x1xf32>
      %80 = vector.shape_cast %79 : vector<32x1xf32> to vector<1x32x1xf32>
      %cst_41 = arith.constant dense<0.000000e+00> : vector<1xf32>
      %81 = vector.multi_reduction <add>, %80, %cst_41 [1, 2] : vector<1x32x1xf32> to vector<1xf32>
      %82 = vector.shape_cast %81 : vector<1xf32> to vector<1x1x1xf32>
      %83 = vector.extract %82[0, 0, 0] : f32 from vector<1x1x1xf32>
      %84 = tpu.iota {dimensions = array<i32: 1>} : vector<8x8xi32>
      %85 = tpu.iota {dimensions = array<i32: 0>} : vector<8x8xi32>
      %86 = arith.subi %84, %85 : vector<8x8xi32>
      %c0_i32_42 = arith.constant 0 : i32
      %87 = vector.broadcast %c0_i32_42 : i32 to vector<8x8xi32>
      %88 = arith.cmpi eq, %86, %87 : vector<8x8xi32>
      %c-4_i32 = arith.constant -4 : i32
      %89 = vector.broadcast %c-4_i32 : i32 to vector<8x8xi32>
      %90 = arith.cmpi sge, %86, %89 : vector<8x8xi32>
      %c-1_i32 = arith.constant -1 : i32
      %91 = vector.broadcast %c-1_i32 : i32 to vector<8x8xi32>
      %92 = arith.cmpi sle, %86, %91 : vector<8x8xi32>
      %93 = arith.andi %90, %92 : vector<8x8xi1>
      %c0_43 = arith.constant 0 : index
      %c0_44 = arith.constant 0 : index
      %94 = vector.load %arg8[%c0_43, %c0_44] : memref<8x8xf32, #tpu.memory_space<vmem>>, vector<8x8xf32>
      %c0_45 = arith.constant 0 : index
      %c0_46 = arith.constant 0 : index
      %c0_47 = arith.constant 0 : index
      %95 = vector.load %arg4[%c0_45, %c0_46, %c0_47] : memref<1x1x8xi32, #tpu.memory_space<vmem>>, vector<1x1x8xi32>
      %96 = vector.shape_cast %95 : vector<1x1x8xi32> to vector<1x8xi32>
      %c0_48 = arith.constant 0 : index
      %c0_49 = arith.constant 0 : index
      %c0_50 = arith.constant 0 : index
      %97 = vector.load %arg5[%c0_48, %c0_49, %c0_50] : memref<1x8x1xi32, #tpu.memory_space<vmem>>, vector<1x8x1xi32>
      %98 = vector.shape_cast %97 : vector<1x8x1xi32> to vector<8x1xi32>
      %cst_51 = arith.constant 0.000000e+00 : f32
      %99 = vector.broadcast %cst_51 : f32 to vector<8x8xf32>
      %100 = arith.select %88, %94, %99 : vector<8x8xi1>, vector<8x8xf32>
      %cst_52 = arith.constant dense<0.000000e+00> : vector<8xf32>
      %101 = vector.multi_reduction <add>, %100, %cst_52 [1] : vector<8x8xf32> to vector<8xf32>
      %102 = vector.shape_cast %101 : vector<8xf32> to vector<8x1xf32>
      %c0_i32_53 = arith.constant 0 : i32
      %103 = vector.broadcast %c0_i32_53 : i32 to vector<1x8xi32>
      %104 = arith.cmpi ne, %96, %103 : vector<1x8xi32>
      %105 = vector.broadcast %104 : vector<1x8xi1> to vector<8x8xi1>
      %106 = arith.andi %93, %105 : vector<8x8xi1>
      %107 = vector.broadcast %96 : vector<1x8xi32> to vector<8x8xi32>
      %108 = vector.broadcast %98 : vector<8x1xi32> to vector<8x8xi32>
      %109 = arith.cmpi ne, %107, %108 : vector<8x8xi32>
      %110 = arith.andi %106, %109 : vector<8x8xi1>
      %111 = vector.broadcast %102 : vector<8x1xf32> to vector<8x8xf32>
      %112 = arith.subf %94, %111 : vector<8x8xf32>
      %113 = math.exp %112 : vector<8x8xf32>
      %cst_54 = arith.constant 0.000000e+00 : f32
      %114 = vector.broadcast %cst_54 : f32 to vector<8x8xf32>
      %115 = arith.select %110, %113, %114 : vector<8x8xi1>, vector<8x8xf32>
      %cst_55 = arith.constant dense<0.000000e+00> : vector<8xf32>
      %116 = vector.multi_reduction <add>, %115, %cst_55 [1] : vector<8x8xf32> to vector<8xf32>
      %117 = vector.shape_cast %116 : vector<8xf32> to vector<8x1xf32>
      %c0_i32_56 = arith.constant 0 : i32
      %118 = vector.broadcast %c0_i32_56 : i32 to vector<8x1xi32>
      %119 = arith.cmpi ne, %98, %118 : vector<8x1xi32>
      %cst_57 = arith.constant 1.000000e+00 : f32
      %120 = vector.broadcast %cst_57 : f32 to vector<8x1xf32>
      %121 = arith.addf %120, %117 : vector<8x1xf32>
      %122 = math.log %121 : vector<8x1xf32>
      %cst_58 = arith.constant 0.000000e+00 : f32
      %123 = vector.broadcast %cst_58 : f32 to vector<8x1xf32>
      %124 = arith.select %119, %122, %123 : vector<8x1xi1>, vector<8x1xf32>
      %125 = vector.shape_cast %124 : vector<8x1xf32> to vector<1x8x1xf32>
      %cst_59 = arith.constant dense<0.000000e+00> : vector<1xf32>
      %126 = vector.multi_reduction <add>, %125, %cst_59 [1, 2] : vector<1x8x1xf32> to vector<1xf32>
      %127 = vector.shape_cast %126 : vector<1xf32> to vector<1x1x1xf32>
      %128 = vector.extract %127[0, 0, 0] : f32 from vector<1x1x1xf32>
      %cst_60 = arith.constant 0.000000e+00 : f32
      %129 = arith.addf %cst_60, %128 : f32
      %130 = arith.extui %119 : vector<8x1xi1> to vector<8x1xi32>
      %131 = arith.sitofp %130 : vector<8x1xi32> to vector<8x1xf32>
      %132 = vector.shape_cast %131 : vector<8x1xf32> to vector<1x8x1xf32>
      %cst_61 = arith.constant dense<0.000000e+00> : vector<1xf32>
      %133 = vector.multi_reduction <add>, %132, %cst_61 [1, 2] : vector<1x8x1xf32> to vector<1xf32>
      %134 = vector.shape_cast %133 : vector<1xf32> to vector<1x1x1xf32>
      %135 = vector.extract %134[0, 0, 0] : f32 from vector<1x1x1xf32>
      %cst_62 = arith.constant 0.000000e+00 : f32
      %136 = arith.addf %cst_62, %135 : f32
      %137 = tpu.iota {dimensions = array<i32: 2>} : vector<1x1x128xi32>
      %c0_i32_63 = arith.constant 0 : i32
      %138 = vector.broadcast %c0_i32_63 : i32 to vector<1x1x128xi32>
      %139 = arith.cmpi eq, %137, %138 : vector<1x1x128xi32>
      %cst_64 = arith.constant 0.000000e+00 : f32
      %140 = vector.broadcast %77 : f32 to vector<1x1x128xf32>
      %141 = vector.broadcast %cst_64 : f32 to vector<1x1x128xf32>
      %142 = arith.select %139, %140, %141 : vector<1x1x128xi1>, vector<1x1x128xf32>
      %c1_i32 = arith.constant 1 : i32
      %143 = vector.broadcast %c1_i32 : i32 to vector<1x1x128xi32>
      %144 = arith.cmpi eq, %137, %143 : vector<1x1x128xi32>
      %cst_65 = arith.constant 0.000000e+00 : f32
      %145 = vector.broadcast %83 : f32 to vector<1x1x128xf32>
      %146 = vector.broadcast %cst_65 : f32 to vector<1x1x128xf32>
      %147 = arith.select %144, %145, %146 : vector<1x1x128xi1>, vector<1x1x128xf32>
      %148 = arith.addf %142, %147 : vector<1x1x128xf32>
      %c2_i32_66 = arith.constant 2 : i32
      %149 = vector.broadcast %c2_i32_66 : i32 to vector<1x1x128xi32>
      %150 = arith.cmpi eq, %137, %149 : vector<1x1x128xi32>
      %cst_67 = arith.constant 0.000000e+00 : f32
      %151 = vector.broadcast %129 : f32 to vector<1x1x128xf32>
      %152 = vector.broadcast %cst_67 : f32 to vector<1x1x128xf32>
      %153 = arith.select %150, %151, %152 : vector<1x1x128xi1>, vector<1x1x128xf32>
      %154 = arith.addf %148, %153 : vector<1x1x128xf32>
      %c3_i32 = arith.constant 3 : i32
      %155 = vector.broadcast %c3_i32 : i32 to vector<1x1x128xi32>
      %156 = arith.cmpi eq, %137, %155 : vector<1x1x128xi32>
      %cst_68 = arith.constant 0.000000e+00 : f32
      %157 = vector.broadcast %136 : f32 to vector<1x1x128xf32>
      %158 = vector.broadcast %cst_68 : f32 to vector<1x1x128xf32>
      %159 = arith.select %156, %157, %158 : vector<1x1x128xi1>, vector<1x1x128xf32>
      %160 = arith.addf %154, %159 : vector<1x1x128xf32>
      %c0_69 = arith.constant 0 : index
      %c0_70 = arith.constant 0 : index
      %c0_71 = arith.constant 0 : index
      %161 = vector.load %arg6[%c0_69, %c0_70, %c0_71] : memref<1x1x128xf32, #tpu.memory_space<vmem>>, vector<1x1x128xf32>
      tpu.vector_store %arg6[%c0_69, %c0_70, %c0_71], %160 {strides = array<i32>} : memref<1x1x128xf32, #tpu.memory_space<vmem>>, vector<1x1x128xf32>,
    } else {
    }
    return
  }
  func.func @transform_0(%arg0: i32, %arg1: i32) -> (i32, i32, i32) {
    %c0_i32 = arith.constant 0 : i32
    %c0_i32_0 = arith.constant 0 : i32
    return %arg0, %c0_i32, %arg1 : i32, i32, i32
  }
  func.func @transform_1(%arg0: i32, %arg1: i32) -> (i32, i32, i32) {
    %c0_i32 = arith.constant 0 : i32
    %c0_i32_0 = arith.constant 0 : i32
    %c0_i32_1 = arith.constant 0 : i32
    return %arg0, %c0_i32, %c0_i32_0 : i32, i32, i32
  }
  func.func @transform_2(%arg0: i32, %arg1: i32) -> (i32, i32, i32) {
    %c0_i32 = arith.constant 0 : i32
    %c0_i32_0 = arith.constant 0 : i32
    %c0_i32_1 = arith.constant 0 : i32
    return %arg0, %c0_i32, %c0_i32_0 : i32, i32, i32
  }
  func.func @transform_3(%arg0: i32, %arg1: i32) -> (i32, i32, i32) {
    %c0_i32 = arith.constant 0 : i32
    %c0_i32_0 = arith.constant 0 : i32
    %c0_i32_1 = arith.constant 0 : i32
    return %arg0, %c0_i32, %c0_i32_0 : i32, i32, i32
  }
  func.func @transform_4(%arg0: i32, %arg1: i32) -> (i32, i32, i32) {
    %c0_i32 = arith.constant 0 : i32
    %c0_i32_0 = arith.constant 0 : i32
    %c0_i32_1 = arith.constant 0 : i32
    return %arg0, %c0_i32, %c0_i32_0 : i32, i32, i32
  }
}

</mosaic_0001>

<llo_original>
// kernel: tpu_custom_call.1
$region0: #{tpu_custom_call.1}
  #allocation0 [shape = 'u32[]', space=smem, size = 0x4, offset = 0x4, fixed_abs, tag = 'smem constant byte address 0x4 - core index']
  #allocation1 [shape = 'u32[144,128]{1,0:T(1,128)}', space=vmem, size = 0x12000, scoped, tag = 'internal scratch']
  #allocation2 [shape = 'f32[32,3]{1,0:T(8,128)}', space=vmem, size = 0x4000, scoped, tag = 'scratch operand']
  #allocation3 [shape = 'f32[8,8]{1,0:T(8,128)}', space=vmem, size = 0x1000, scoped, tag = 'scratch operand']
  %s0 = inlined_call_operand.hbm [shape: bf16[2,32,384], index: 0, kind: input, shape index: {}]
  %s1 = inlined_call_operand.vmem [shape: s32[2,32,1], index: 1, kind: input, shape index: {}]
  %s2 = inlined_call_operand.vmem [shape: s32[2,1,8], index: 2, kind: input, shape index: {}]
  %s3 = inlined_call_operand.vmem [shape: s32[2,8,1], index: 3, kind: input, shape index: {}]
  %s4 = inlined_call_operand.hbm [shape: f32[2,1,128], index: 4, kind: output, shape index: {}]
  %s5 = sld [smem:[#allocation0]]
  $region61: #{tpu_custom_call.1} parent=0
    _
  %s7 = ssub.s32 1, %s5
  %s8 = scalar_select 0, %s7, %s5
  $region1: #{tpu_custom_call.1} parent=0
    #allocation4 [shape = 'u8[16384]{0}', space=vmem, size = 0x4000, scoped, tag = 'input window, operand 0']
    #allocation5 [shape = 's32[2]{0}', space=sflag, size = 0x8, scoped, tag = 'scoped memory for tpu_custom_call.1']
    #allocation6 [shape = 's32[2]{0}', space=sflag, size = 0x8, scoped, tag = 'scoped memory for tpu_custom_call.1']
    #allocation7 [shape = 'u8[1024]{0}', space=vmem, size = 0x400, scoped, tag = 'output window, operand 0']
    %9 = vsyncpa [#allocation5], 0
    %s10 = scalar_lea.sflag [#allocation5], 1
    %11 = vsyncpa %s10, 0
    %12 = vsyncpa [#allocation6], 0
    %s13 = scalar_lea.sflag [#allocation6], 1
    %14 = vsyncpa %s13, 0
    loop: start=0, step=1, limit=8
    $region2: #{tpu_custom_call.1} parent=1 // loop_pre_header
      _
    $region3: #{tpu_custom_call.1} parent=1 // loop_header
      %s16 = sphi 0, %s20
      %p17 = scmp.ge.s32.totalorder %s16, 8
      %s23 = sphi 0, %s35
      %s24 = sphi 0, %s31
      %s25 = sphi 0, %s23
      %s26 = sphi 0, %s24
      %s27 = sphi 0, %s25
      %s28 = sphi 0, %s26
      %s40 = sphi 0, %s42
      %s43 = sphi 0, %s40
      %s44 = sphi 0, %s43
      %s60 = sphi 0, %s44
      %s66 = sphi 0, %s68
      %s69 = sphi 0, %s66
      %s70 = sphi 0, %s69
      %s86 = sphi 0, %s70
      %s92 = sphi 0, %s94
      %s95 = sphi 0, %s92
      %s96 = sphi 0, %s95
      %s112 = sphi 0, %s96
      %s118 = sphi 0, %s120
      %s121 = sphi 0, %s118
      %s122 = sphi 0, %s121
      %s138 = sphi 0, %s122
      %s144 = sphi 0, %s146
      %s147 = sphi 0, %s144
      %s148 = sphi 0, %s147
      %s164 = sphi 0, %s148
    $region4: #{tpu_custom_call.1} parent=1 // loop_header_branch
      %19 = sbr.rel (%p17) target = $region8
    $region5: #{tpu_custom_call.1} parent=1 // loop_body
      %s21 = ssub.s32 %s16, 1
      %s22 = ssub.s32 %s16, 2
      %s29 = sadd.s32 1, %s24
      %p30 = scmp.ge.s32.totalorder %s29, 3
      %s31 = scalar_select %p30, 0, %s29
      %s32 = sadd.s32 1, %s23
      %s33 = scalar_select %p30, %s32, %s23
      %p34 = scmp.ge.s32.totalorder %s33, 2
      %s35 = scalar_select %p34, 0, %s33
      %s36 = ssub.s32 %s23, %s35
      %s37 = ssub.s32 %s24, %s31
      %s38 = sor.u32 %s36, %s37
      %p39 = scmp.eq.s32.totalorder %s38, 0
      %s41 = sadd.s32 %s40, 1
      %s42 = scalar_select %p39, %s40, %s41
      %p45 = pneg %p39
      %p46 = scmp.eq.s32.totalorder %s16, 5
      %p47 = por %p45, %p46
      %p48 = scmp.ne.s32.totalorder %s40, %s43
      %p49 = scmp.eq.s32.totalorder %s16, 0
      %p50 = por %p48, %p49
      %p51 = scmp.ne.s32.totalorder %s40, %s43
      %p52 = scmp.eq.s32.totalorder %s21, 5
      %p53 = por %p51, %p52
      %p54 = scmp.ne.s32.totalorder %s43, %s44
      %p55 = scmp.eq.s32.totalorder %s21, 0
      %p56 = por %p54, %p55
      %p57 = scmp.ne.s32.totalorder %s43, %s44
      %p58 = scmp.eq.s32.totalorder %s22, 5
      %p59 = por %p57, %p58
      %p61 = scmp.ne.s32.totalorder %s44, %s60
      %p62 = scmp.eq.s32.totalorder %s22, 0
      %p63 = por %p61, %p62
      %s64 = ssub.s32 %s23, %s35
      %p65 = scmp.eq.s32.totalorder %s64, 0
      %s67 = sadd.s32 %s66, 1
      %s68 = scalar_select %p65, %s66, %s67
      %p71 = pneg %p65
      %p72 = scmp.eq.s32.totalorder %s16, 5
      %p73 = por %p71, %p72
      %p74 = scmp.ne.s32.totalorder %s66, %s69
      %p75 = scmp.eq.s32.totalorder %s16, 0
      %p76 = por %p74, %p75
      %p77 = scmp.ne.s32.totalorder %s66, %s69
      %p78 = scmp.eq.s32.totalorder %s21, 5
      %p79 = por %p77, %p78
      %p80 = scmp.ne.s32.totalorder %s69, %s70
      %p81 = scmp.eq.s32.totalorder %s21, 0
      %p82 = por %p80, %p81
      %p83 = scmp.ne.s32.totalorder %s69, %s70
      %p84 = scmp.eq.s32.totalorder %s22, 5
      %p85 = por %p83, %p84
      %p87 = scmp.ne.s32.totalorder %s70, %s86
      %p88 = scmp.eq.s32.totalorder %s22, 0
      %p89 = por %p87, %p88
      %s90 = ssub.s32 %s23, %s35
      %p91 = scmp.eq.s32.totalorder %s90, 0
      %s93 = sadd.s32 %s92, 1
      %s94 = scalar_select %p91, %s92, %s93
      %p97 = pneg %p91
      %p98 = scmp.eq.s32.totalorder %s16, 5
      %p99 = por %p97, %p98
      %p100 = scmp.ne.s32.totalorder %s92, %s95
      %p101 = scmp.eq.s32.totalorder %s16, 0
      %p102 = por %p100, %p101
      %p103 = scmp.ne.s32.totalorder %s92, %s95
      %p104 = scmp.eq.s32.totalorder %s21, 5
      %p105 = por %p103, %p104
      %p106 = scmp.ne.s32.totalorder %s95, %s96
      %p107 = scmp.eq.s32.totalorder %s21, 0
      %p108 = por %p106, %p107
      %p109 = scmp.ne.s32.totalorder %s95, %s96
      %p110 = scmp.eq.s32.totalorder %s22, 5
      %p111 = por %p109, %p110
      %p113 = scmp.ne.s32.totalorder %s96, %s112
      %p114 = scmp.eq.s32.totalorder %s22, 0
      %p115 = por %p113, %p114
      %s116 = ssub.s32 %s23, %s35
      %p117 = scmp.eq.s32.totalorder %s116, 0
      %s119 = sadd.s32 %s118, 1
      %s120 = scalar_select %p117, %s118, %s119
      %p123 = pneg %p117
      %p124 = scmp.eq.s32.totalorder %s16, 5
      %p125 = por %p123, %p124
      %p126 = scmp.ne.s32.totalorder %s118, %s121
      %p127 = scmp.eq.s32.totalorder %s16, 0
      %p128 = por %p126, %p127
      %p129 = scmp.ne.s32.totalorder %s118, %s121
      %p130 = scmp.eq.s32.totalorder %s21, 5
      %p131 = por %p129, %p130
      %p132 = scmp.ne.s32.totalorder %s121, %s122
      %p133 = scmp.eq.s32.totalorder %s21, 0
      %p134 = por %p132, %p133
      %p135 = scmp.ne.s32.totalorder %s121, %s122
      %p136 = scmp.eq.s32.totalorder %s22, 5
      %p137 = por %p135, %p136
      %p139 = scmp.ne.s32.totalorder %s122, %s138
      %p140 = scmp.eq.s32.totalorder %s22, 0
      %p141 = por %p139, %p140
      %s142 = ssub.s32 %s23, %s35
      %p143 = scmp.eq.s32.totalorder %s142, 0
      %s145 = sadd.s32 %s144, 1
      %s146 = scalar_select %p143, %s144, %s145
      %p149 = pneg %p143
      %p150 = scmp.eq.s32.totalorder %s16, 5
      %p151 = por %p149, %p150
      %p152 = scmp.ne.s32.totalorder %s144, %s147
      %p153 = scmp.eq.s32.totalorder %s16, 0
      %p154 = por %p152, %p153
      %p155 = scmp.ne.s32.totalorder %s144, %s147
      %p156 = scmp.eq.s32.totalorder %s21, 5
      %p157 = por %p155, %p156
      %p158 = scmp.ne.s32.totalorder %s147, %s148
      %p159 = scmp.eq.s32.totalorder %s21, 0
      %p160 = por %p158, %p159
      %p161 = scmp.ne.s32.totalorder %s147, %s148
      %p162 = scmp.eq.s32.totalorder %s22, 5
      %p163 = por %p161, %p162
      %p165 = scmp.ne.s32.totalorder %s148, %s164
      %p166 = scmp.eq.s32.totalorder %s22, 0
      %p167 = por %p165, %p166
      %p168 = scmp.le.s32.totalorder 1, %s16
      %p169 = scmp.lt.s32.totalorder %s16, 7
      %p170 = pnand %p168, %p169
      %p171 = pneg %p170
      // Predicated region
      $region9: #{tpu_custom_call.1} parent=5 // pred_check
        _
      $region10: #{tpu_custom_call.1} parent=5 // pred_check_branch
        %173 = sbr.rel (%p170) target = $region12
      $region11: #{tpu_custom_call.1} parent=5 // pred_region
        %s174 = ssub.s32 %s16, 1
      $region12: #{tpu_custom_call.1} parent=5 // pred_fallthru
        _
      %p175 = scmp.lt.s32.totalorder %s16, 6
      // Predicated region
      $region13: #{tpu_custom_call.1} parent=5 // pred_check
        %p176 = pneg %p175
      $region14: #{tpu_custom_call.1} parent=5 // pred_check_branch
        %178 = sbr.rel (%p176) target = $region16
      $region15: #{tpu_custom_call.1} parent=5 // pred_region
        // Predicated region
        $region17: #{tpu_custom_call.1} parent=15 // pred_check
          %p179 = pneg %p50
        $region18: #{tpu_custom_call.1} parent=15 // pred_check_branch
          %181 = sbr.rel (%p179) target = $region20
        $region19: #{tpu_custom_call.1} parent=15 // pred_region
          %s182 = sand.u32 %s40, 1
          %s183 = scalar_lea.sflag [#allocation5], %s182
          %s184 = sand.u32 %s40, 1
          %s185 = smul.addr %s184, 16
          %s186 = scalar_lea.vmem [#allocation4], %s185
          %s188 = ssub.s32 256, 256
          %189 = vsyncadd %s183, %s188
          %s190 = smul.addr %s23, 12
          %s191 = sadd.s32 %s24, %s190
          %s192 = smul.addr %s191, 64
          %s193 = scalar_lea.hbm %s0, %s192
          %s194 = sshll.u32 %s186, 4
          %s195 = int_to_ptr.vmem [resolvable:$true] %s194
          %200 = dma.hbm_to_vmem [thread:$0]  %s193, 256, %s195, %s183, 192, 64, 4
        $region20: #{tpu_custom_call.1} parent=15 // pred_fallthru
          _
        // Predicated region
        $region21: #{tpu_custom_call.1} parent=15 // pred_check
          %p201 = pneg %p76
        $region22: #{tpu_custom_call.1} parent=15 // pred_check_branch
          %203 = sbr.rel (%p201) target = $region24
        $region23: #{tpu_custom_call.1} parent=15 // pred_region
          %p204 = scmp.lt.s32.totalorder %s23, 1
          %s205 = scalar_select %p204, %s23, 1
          %s206 = smul.addr %s205, 4
          %s207 = smul.addr %s206, 8
          %s208 = scalar_lea.vmem %s1, %s207
        $region24: #{tpu_custom_call.1} parent=15 // pred_fallthru
          _
        // Predicated region
        $region25: #{tpu_custom_call.1} parent=15 // pred_check
          %p209 = pneg %p102
        $region26: #{tpu_custom_call.1} parent=15 // pred_check_branch
          %211 = sbr.rel (%p209) target = $region28
        $region27: #{tpu_custom_call.1} parent=15 // pred_region
          %p212 = scmp.lt.s32.totalorder %s23, 1
          %s213 = scalar_select %p212, %s23, 1
          %s214 = scalar_lea.vmem %s2, %s213
        $region28: #{tpu_custom_call.1} parent=15 // pred_fallthru
          _
        // Predicated region
        $region29: #{tpu_custom_call.1} parent=15 // pred_check
          %p215 = pneg %p128
        $region30: #{tpu_custom_call.1} parent=15 // pred_check_branch
          %217 = sbr.rel (%p215) target = $region32
        $region31: #{tpu_custom_call.1} parent=15 // pred_region
          %p218 = scmp.lt.s32.totalorder %s23, 1
          %s219 = scalar_select %p218, %s23, 1
          %s220 = smul.addr %s219, 8
          %s221 = scalar_lea.vmem %s3, %s220
        $region32: #{tpu_custom_call.1} parent=15 // pred_fallthru
          _
      $region16: #{tpu_custom_call.1} parent=5 // pred_fallthru
        _
      %p222 = scmp.le.s32.totalorder 1, %s16
      %p223 = scmp.lt.s32.totalorder %s16, 7
      %p224 = pnand %p222, %p223
      %p225 = pneg %p224
      // Predicated region
      $region33: #{tpu_custom_call.1} parent=5 // pred_check
        _
      $region34: #{tpu_custom_call.1} parent=5 // pred_check_branch
        %227 = sbr.rel (%p224) target = $region36
      $region35: #{tpu_custom_call.1} parent=5 // pred_region
        %s228 = ssub.s32 %s16, 1
        %s229 = sand.u32 %s43, 1
        %s230 = scalar_lea.sflag [#allocation5], %s229
        %s231 = sand.u32 %s43, 1
        %s232 = smul.addr %s231, 16
        %s233 = scalar_lea.vmem [#allocation4], %s232
        // Predicated region
        $region37: #{tpu_custom_call.1} parent=35 // pred_check
          %p234 = pneg %p56
        $region38: #{tpu_custom_call.1} parent=35 // pred_check_branch
          %236 = sbr.rel (%p234) target = $region40
        $region39: #{tpu_custom_call.1} parent=35 // pred_region
          %237 = dma.done %s230, 256
        $region40: #{tpu_custom_call.1} parent=35 // pred_fallthru
          _
        %s238 = sand.u32 %s43, 1
        %s239 = scalar_lea.sflag [#allocation5], %s238
        %s240 = sand.u32 %s43, 1
        %s241 = smul.addr %s240, 16
        %s242 = scalar_lea.vmem [#allocation4], %s241
        %p243 = pneg %p56
        %p244 = pneg %p53
        %p245 = scmp.lt.s32.totalorder %s25, 1
        %s246 = scalar_select %p245, %s25, 1
        %s247 = smul.addr %s246, 4
        %s248 = smul.addr %s247, 8
        %s249 = scalar_lea.vmem %s1, %s248
        %p250 = pneg %p82
        %p251 = pneg %p79
        %p252 = scmp.lt.s32.totalorder %s25, 1
        %s253 = scalar_select %p252, %s25, 1
        %s254 = scalar_lea.vmem %s2, %s253
        %p255 = pneg %p108
        %p256 = pneg %p105
        %p257 = scmp.lt.s32.totalorder %s25, 1
        %s258 = scalar_select %p257, %s25, 1
        %s259 = smul.addr %s258, 8
        %s260 = scalar_lea.vmem %s3, %s259
        %p261 = pneg %p134
        %p262 = pneg %p131
        %p263 = pneg %p160
        %p264 = pneg %p157
        %s265 = sand.u32 %s147, 1
        %s266 = scalar_lea.sflag [#allocation6], %s265
        %s267 = sand.u32 %s147, 1
        %s268 = scalar_lea.vmem [#allocation7], %s267
        %p269 = scmp.lt.s32.totalorder %s25, 1
        %s270 = scalar_select %p269, %s25, 1
        %s271 = smul.addr %s270, 4
        %s272 = smul.addr %s271, 8
        %s273 = scalar_lea.vmem %s1, %s272
        %p274 = scmp.lt.s32.totalorder %s25, 1
        %s275 = scalar_select %p274, %s25, 1
        %s276 = scalar_lea.vmem %s2, %s275
        %p277 = scmp.lt.s32.totalorder %s25, 1
        %s278 = scalar_select %p277, %s25, 1
        %s279 = smul.addr %s278, 8
        %s280 = scalar_lea.vmem %s3, %s279
        %s284 = smul.u32 %s26, 128
        %p285 = scmp.eq.s32.totalorder %s26, 0
        // Predicated region
        $region41: #{tpu_custom_call.1} parent=35 // pred_check
          %p286 = pneg %p285
        $region42: #{tpu_custom_call.1} parent=35 // pred_check_branch
          %288 = sbr.rel (%p286) target = $region44
        $region43: #{tpu_custom_call.1} parent=35 // pred_region
          %v289 = vlaneseq
          %v290 = vand.u32 %v289, 127
          %vm291 = vcmp.eq.s32.totalorder %v290, 0
          %v292 = vsel %vm291, -inf, 0.0
          %vm293 = vcmask 23552
          %294 = vst.msk [vmem:[#allocation2] sm:$0xff] %vm293, %v292
          %295 = vst.msk [vmem:[#allocation2 + $0x8] sm:$0xff] %vm293, %v292
          %296 = vst.msk [vmem:[#allocation2 + $0x10] sm:$0xff] %vm293, %v292
          %297 = vst.msk [vmem:[#allocation2 + $0x18] sm:$0xff] %vm293, %v292
          %vm298 = vcmask 64512
          %299 = vst.msk [vmem:[#allocation3] sm:$0xff] %vm298, 0.0
        $region44: #{tpu_custom_call.1} parent=35 // pred_fallthru
          _
        %v300 = vld [vmem:[%s233] sm:$0xf]
        %v301 = vld [vmem:[%s233 + $0x4] sm:$0xf]
        %v302 = vld [vmem:[%s233 + $0x8] sm:$0xf]
        %v303 = vld [vmem:[%s233 + $0xc] sm:$0xf]
        %v304 = vunpack.c.l.bf16 %v300
        %v305 = vunpack.c.l.bf16 %v301
        %v306 = vunpack.c.l.bf16 %v302
        %v307 = vunpack.c.l.bf16 %v303
        %v308 = vlaneseq
        %v309 = vand.u32 %v308, 127
        %v310 = vld [vmem:[%s273] sm:$0xff]
        %v311 = vld [vmem:[%s273 + $0x8] sm:$0xff]
        %v312 = vld [vmem:[%s273 + $0x10] sm:$0xff]
        %v313 = vld [vmem:[%s273 + $0x18] sm:$0xff]
        %v314 = vstv %s284
        %v315 = vsub.s32 %v310, %v314
        %v316 = vsub.s32 %v311, %v314
        %v317 = vsub.s32 %v312, %v314
        %v318 = vsub.s32 %v313, %v314
        %319 = vset.pattern.permute.xlu0 0
        %320 = vperm.xlu0 %319, %v315
        %v321 = vpop.permute.xlu0 %320
        %322 = vset.pattern.permute.xlu0 0
        %323 = vperm.xlu0 %322, %v316
        %v324 = vpop.permute.xlu0 %323
        %325 = vset.pattern.permute.xlu0 0
        %326 = vperm.xlu0 %325, %v317
        %v327 = vpop.permute.xlu0 %326
        %328 = vset.pattern.permute.xlu0 0
        %329 = vperm.xlu0 %328, %v318
        %v330 = vpop.permute.xlu0 %329
        %vm331 = vcmp.eq.s32.totalorder %v309, %v321
        %vm332 = vcmp.eq.s32.totalorder %v309, %v324
        %vm333 = vcmp.eq.s32.totalorder %v309, %v327
        %vm334 = vcmp.eq.s32.totalorder %v309, %v330
        %v335 = vld [vmem:[#allocation2] sm:$0xff]
        %v336 = vld [vmem:[#allocation2 + $0x8] sm:$0xff]
        %v337 = vld [vmem:[#allocation2 + $0x10] sm:$0xff]
        %v338 = vld [vmem:[#allocation2 + $0x18] sm:$0xff]
        %339 = vmax.xlane.f32.xlu0 %v304
        %v340 = vpop.xlane.xlu0 %339
        %341 = vmax.xlane.f32.xlu0 %v305
        %v342 = vpop.xlane.xlu0 %341
        %343 = vmax.xlane.f32.xlu0 %v306
        %v344 = vpop.xlane.xlu0 %343
        %345 = vmax.xlane.f32.xlu0 %v307
        %v346 = vpop.xlane.xlu0 %345
        %v347 = vmax.f32 %v335, %v340
        %v348 = vmax.f32 %v336, %v342
        %v349 = vmax.f32 %v337, %v344
        %v350 = vmax.f32 %v338, %v346
        %vm351 = vcmask 7168
        %352 = vst.msk [vmem:[#allocation2] sm:$0xff] %vm351, %v347
        %353 = vst.msk [vmem:[#allocation2 + $0x8] sm:$0xff] %vm351, %v348
        %354 = vst.msk [vmem:[#allocation2 + $0x10] sm:$0xff] %vm351, %v349
        %355 = vst.msk [vmem:[#allocation2 + $0x18] sm:$0xff] %vm351, %v350
        %v356 = vsub.f32 %v335, %v347
        %v357 = vsub.f32 %v336, %v348
        %v358 = vsub.f32 %v337, %v349
        %v359 = vsub.f32 %v338, %v350
        %v360 = vmul.f32 %v356, 1.442695
        %v361 = vpow.pop %v360
        %v362 = vmul.f32 %v357, 1.442695
        %v363 = vpow.pop %v362
        %v364 = vmul.f32 %v358, 1.442695
        %v365 = vpow.pop %v364
        %v366 = vmul.f32 %v359, 1.442695
        %v367 = vpow.pop %v366
        %372 = vrot.lane.b32.xlu0 %v361, 1
        %v373 = vpop.permute.xlu0 %372
        %374 = vrot.lane.b32.xlu0 %v363, 1
        %v375 = vpop.permute.xlu0 %374
        %376 = vrot.lane.b32.xlu0 %v365, 1
        %v377 = vpop.permute.xlu0 %376
        %378 = vrot.lane.b32.xlu0 %v367, 1
        %v379 = vpop.permute.xlu0 %378
        %v384 = vmul.f32 %v335, %v373
        %v385 = vmul.f32 %v336, %v375
        %v386 = vmul.f32 %v337, %v377
        %v387 = vmul.f32 %v338, %v379
        %389 = vset.pattern.permute.xlu0 0
        %390 = vperm.xlu0 %389, %v347
        %v391 = vpop.permute.xlu0 %390
        %394 = vset.pattern.permute.xlu0 0
        %395 = vperm.xlu0 %394, %v348
        %v396 = vpop.permute.xlu0 %395
        %399 = vset.pattern.permute.xlu0 0
        %400 = vperm.xlu0 %399, %v349
        %v401 = vpop.permute.xlu0 %400
        %404 = vset.pattern.permute.xlu0 0
        %405 = vperm.xlu0 %404, %v350
        %v406 = vpop.permute.xlu0 %405
        %v408 = vsub.f32 %v304, %v391
        %v409 = vsub.f32 %v305, %v396
        %v410 = vsub.f32 %v306, %v401
        %v411 = vsub.f32 %v307, %v406
        %v412 = vmul.f32 %v408, 1.442695
        %v413 = vpow.pop %v412
        %v414 = vmul.f32 %v409, 1.442695
        %v415 = vpow.pop %v414
        %v416 = vmul.f32 %v410, 1.442695
        %v417 = vpow.pop %v416
        %v418 = vmul.f32 %v411, 1.442695
        %v419 = vpow.pop %v418
        %420 = vadd.xlane.f32.xlu0 %v413
        %v421 = vpop.xlane.xlu0 %420
        %422 = vadd.xlane.f32.xlu0 %v415
        %v423 = vpop.xlane.xlu0 %422
        %424 = vadd.xlane.f32.xlu0 %v417
        %v425 = vpop.xlane.xlu0 %424
        %426 = vadd.xlane.f32.xlu0 %v419
        %v427 = vpop.xlane.xlu0 %426
        %v428 = vadd.f32 %v384, %v421
        %v429 = vadd.f32 %v385, %v423
        %v430 = vadd.f32 %v386, %v425
        %v431 = vadd.f32 %v387, %v427
        %vm432 = vcmask 15368
        %433 = vst.msk [vmem:[#allocation2] sm:$0xff] %vm432, %v428
        %434 = vst.msk [vmem:[#allocation2 + $0x8] sm:$0xff] %vm432, %v429
        %435 = vst.msk [vmem:[#allocation2 + $0x10] sm:$0xff] %vm432, %v430
        %436 = vst.msk [vmem:[#allocation2 + $0x18] sm:$0xff] %vm432, %v431
        %v437 = vld [vmem:[#allocation2] sm:$0xff]
        %v438 = vld [vmem:[#allocation2 + $0x8] sm:$0xff]
        %v439 = vld [vmem:[#allocation2 + $0x10] sm:$0xff]
        %v440 = vld [vmem:[#allocation2 + $0x18] sm:$0xff]
        %v441 = vsel %vm331, %v304, 0.0
        %v442 = vsel %vm332, %v305, 0.0
        %v443 = vsel %vm333, %v306, 0.0
        %v444 = vsel %vm334, %v307, 0.0
        %445 = vadd.xlane.f32.xlu0 %v441
        %v446 = vpop.xlane.xlu0 %445
        %447 = vadd.xlane.f32.xlu0 %v442
        %v448 = vpop.xlane.xlu0 %447
        %449 = vadd.xlane.f32.xlu0 %v443
        %v450 = vpop.xlane.xlu0 %449
        %451 = vadd.xlane.f32.xlu0 %v444
        %v452 = vpop.xlane.xlu0 %451
        %v453 = vadd.f32 %v437, %v446
        %v454 = vadd.f32 %v438, %v448
        %v455 = vadd.f32 %v439, %v450
        %v456 = vadd.f32 %v440, %v452
        %vm457 = vcmask 23568
        %458 = vst.msk [vmem:[#allocation2] sm:$0xff] %vm457, %v453
        %459 = vst.msk [vmem:[#allocation2 + $0x8] sm:$0xff] %vm457, %v454
        %460 = vst.msk [vmem:[#allocation2 + $0x10] sm:$0xff] %vm457, %v455
        %461 = vst.msk [vmem:[#allocation2 + $0x18] sm:$0xff] %vm457, %v456
        %v462 = vld [vmem:[%s233] sm:$0xf]
        %v463 = vmax.bf16 %v462, 3240149280
        %v464 = vmin.bf16 %v463, 1092632864
        %v465 = vld [vmem:[%s276] sm:$0x1]
        %v466 = vsub.s32 %v465, %v314
        %v467 = vlaneseq
        %v468 = vshrl.u32 %v467, 7
        %v469 = vadd.s32 %v468, 8
        %v470 = vadd.s32 %v468, 16
        %v471 = vadd.s32 %v468, 24
        %v472 = vadd.s32 %v468, 32
        %v473 = vadd.s32 %v468, 40
        %v474 = vadd.s32 %v468, 48
        %v475 = vadd.s32 %v468, 56
        %v476 = vadd.s32 %v468, 64
        %v477 = vadd.s32 %v468, 72
        %v478 = vadd.s32 %v468, 80
        %v479 = vadd.s32 %v468, 88
        %v480 = vadd.s32 %v468, 96
        %v481 = vadd.s32 %v468, 104
        %v482 = vadd.s32 %v468, 112
        %v483 = vadd.s32 %v468, 120
        %v484 = vlaneseq
        %v485 = vshrl.u32 %v484, 7
        %v486 = vsub.s32 0, %v485
        %v487 = vrot.slane %v466, %v486
        %vm488 = vcmp.eq.s32.totalorder %v468, %v487
        %vm489 = vcmp.eq.s32.totalorder %v469, %v487
        %vm490 = vcmp.eq.s32.totalorder %v470, %v487
        %vm491 = vcmp.eq.s32.totalorder %v471, %v487
        %vm492 = vcmp.eq.s32.totalorder %v472, %v487
        %vm493 = vcmp.eq.s32.totalorder %v473, %v487
        %vm494 = vcmp.eq.s32.totalorder %v474, %v487
        %vm495 = vcmp.eq.s32.totalorder %v475, %v487
        %vm496 = vcmp.eq.s32.totalorder %v476, %v487
        %vm497 = vcmp.eq.s32.totalorder %v477, %v487
        %vm498 = vcmp.eq.s32.totalorder %v478, %v487
        %vm499 = vcmp.eq.s32.totalorder %v479, %v487
        %vm500 = vcmp.eq.s32.totalorder %v480, %v487
        %vm501 = vcmp.eq.s32.totalorder %v481, %v487
        %vm502 = vcmp.eq.s32.totalorder %v482, %v487
        %vm503 = vcmp.eq.s32.totalorder %v483, %v487
        %v504 = vsel %vm488, 1, 0
        %v505 = vsel %vm489, 1, 0
        %v506 = vsel %vm490, 1, 0
        %v507 = vsel %vm491, 1, 0
        %v508 = vsel %vm492, 1, 0
        %v509 = vsel %vm493, 1, 0
        %v510 = vsel %vm494, 1, 0
        %v511 = vsel %vm495, 1, 0
        %v512 = vsel %vm496, 1, 0
        %v513 = vsel %vm497, 1, 0
        %v514 = vsel %vm498, 1, 0
        %v515 = vsel %vm499, 1, 0
        %v516 = vsel %vm500, 1, 0
        %v517 = vsel %vm501, 1, 0
        %v518 = vsel %vm502, 1, 0
        %v519 = vsel %vm503, 1, 0
        %v520 = vcvt.s32.f32 %v504
        %v521 = vcvt.s32.f32 %v505
        %v522 = vcvt.s32.f32 %v506
        %v523 = vcvt.s32.f32 %v507
        %v524 = vcvt.s32.f32 %v508
        %v525 = vcvt.s32.f32 %v509
        %v526 = vcvt.s32.f32 %v510
        %v527 = vcvt.s32.f32 %v511
        %v528 = vcvt.s32.f32 %v512
        %v529 = vcvt.s32.f32 %v513
        %v530 = vcvt.s32.f32 %v514
        %v531 = vcvt.s32.f32 %v515
        %v532 = vcvt.s32.f32 %v516
        %v533 = vcvt.s32.f32 %v517
        %v534 = vcvt.s32.f32 %v518
        %v535 = vcvt.s32.f32 %v519
        %v536 = vpack.c.bf16 %v521, %v520
        %v537 = vpack.c.bf16 %v523, %v522
        %v538 = vpack.c.bf16 %v525, %v524
        %v539 = vpack.c.bf16 %v527, %v526
        %v540 = vpack.c.bf16 %v529, %v528
        %v541 = vpack.c.bf16 %v531, %v530
        %v542 = vpack.c.bf16 %v533, %v532
        %v543 = vpack.c.bf16 %v535, %v534
        %544 = vmatprep.subr.bf16.mxu0 0
        %545 = vmatpush1.bf16.msra.mxu0 %v536
        %546 = vmatprep.subr.bf16.mxu0 0
        %547 = vmatpush1.bf16.msra.mxu0 %v537
        %548 = vmatprep.subr.bf16.mxu0 0
        %549 = vmatpush1.bf16.msra.mxu0 %v538
        %550 = vmatprep.subr.bf16.mxu0 0
        %551 = vmatpush1.bf16.msra.mxu0 %v539
        %552 = vmatprep.subr.bf16.mxu0 0
        %553 = vmatpush1.bf16.msra.mxu0 %v540
        %554 = vmatprep.subr.bf16.mxu0 0
        %555 = vmatpush1.bf16.msra.mxu0 %v541
        %556 = vmatprep.subr.bf16.mxu0 0
        %557 = vmatpush1.bf16.msra.mxu0 %v542
        %558 = vmatprep.subr.bf16.mxu0 0
        %559 = vmatpush1.bf16.msra.mxu0 %v543
        %560 = vmatprep.subr.bf16.mxu0 0
        %561 = vmatpush1.bf16.msra.mxu0 0
        %562 = vmatprep.subr.bf16.mxu0 0
        %563 = vmatpush1.bf16.msra.mxu0 0
        %564 = vmatprep.subr.bf16.mxu0 0
        %565 = vmatpush1.bf16.msra.mxu0 0
        %566 = vmatprep.subr.bf16.mxu0 0
        %567 = vmatpush1.bf16.msra.mxu0 0
        %568 = vmatprep.subr.bf16.mxu0 0
        %569 = vmatpush1.bf16.msra.mxu0 0
        %570 = vmatprep.subr.bf16.mxu0 0
        %571 = vmatpush1.bf16.msra.mxu0 0
        %572 = vmatprep.subr.bf16.mxu0 0
        %573 = vmatpush1.bf16.msra.mxu0 0
        %574 = vmatprep.subr.bf16.mxu0 0
        %575 = vmatpush1.bf16.msra.mxu0 0
        %576 = vmatprep.mubr.bf16.mxu0 0
        %577 = vmatmul.mubr.bf16.gmra.mrb[0].mxu0 %v464
        %v578 = vpop.f32.mrb[0].mxu0
        %v579 = vadd.f32 0.0, %v578
        %v580 = vpop.f32.mrb[0].mxu0
        %v581 = vpop.f32.mrb[0].mxu0
        %v582 = vpop.f32.mrb[0].mxu0
        %583 = vdwg.mxu0
        %v584 = vld [vmem:[#allocation3] sm:$0xff]
        %v585 = vadd.f32 %v584, %v579
        %vm586 = vcmask 64512
        %587 = vst.msk [vmem:[#allocation3] sm:$0xff] %vm586, %v585
        %p588 = scmp.eq.s32.totalorder %s26, 2
        // Predicated region
        $region45: #{tpu_custom_call.1} parent=35 // pred_check
          %p589 = pneg %p588
        $region46: #{tpu_custom_call.1} parent=35 // pred_check_branch
          %591 = sbr.rel (%p589) target = $region48
        $region47: #{tpu_custom_call.1} parent=35 // pred_region
          %v592 = vld [vmem:[#allocation2] sm:$0xff]
          %v593 = vld [vmem:[#allocation2 + $0x8] sm:$0xff]
          %v594 = vld [vmem:[#allocation2 + $0x10] sm:$0xff]
          %v595 = vld [vmem:[#allocation2 + $0x18] sm:$0xff]
          %v596 = vlog2.pop %v592
          %v597 = vmul.f32 %v596, 0.6931472
          %v598 = vlog2.pop %v593
          %v599 = vmul.f32 %v598, 0.6931472
          %v600 = vlog2.pop %v594
          %v601 = vmul.f32 %v600, 0.6931472
          %v602 = vlog2.pop %v595
          %v603 = vmul.f32 %v602, 0.6931472
          %608 = vrot.lane.b32.xlu0 %v597, 127
          %v609 = vpop.permute.xlu0 %608
          %610 = vrot.lane.b32.xlu0 %v599, 127
          %v611 = vpop.permute.xlu0 %610
          %612 = vrot.lane.b32.xlu0 %v601, 127
          %v613 = vpop.permute.xlu0 %612
          %614 = vrot.lane.b32.xlu0 %v603, 127
          %v615 = vpop.permute.xlu0 %614
          %v620 = vadd.f32 %v592, %v609
          %v621 = vadd.f32 %v593, %v611
          %v622 = vadd.f32 %v594, %v613
          %v623 = vadd.f32 %v595, %v615
          %vm624 = vcmp.ne.s32.totalorder %v310, 4294967196
          %vm625 = vcmp.ne.s32.totalorder %v311, 4294967196
          %vm626 = vcmp.ne.s32.totalorder %v312, 4294967196
          %vm627 = vcmp.ne.s32.totalorder %v313, 4294967196
          %632 = vrot.lane.b32.xlu0 %v592, 126
          %v633 = vpop.permute.xlu0 %632
          %634 = vrot.lane.b32.xlu0 %v593, 126
          %v635 = vpop.permute.xlu0 %634
          %636 = vrot.lane.b32.xlu0 %v594, 126
          %v637 = vpop.permute.xlu0 %636
          %638 = vrot.lane.b32.xlu0 %v595, 126
          %v639 = vpop.permute.xlu0 %638
          %v644 = vsub.f32 %v620, %v633
          %v645 = vsub.f32 %v621, %v635
          %v646 = vsub.f32 %v622, %v637
          %v647 = vsub.f32 %v623, %v639
          %v648 = vsel %vm624, %v644, 0.0
          %v649 = vsel %vm625, %v645, 0.0
          %v650 = vsel %vm626, %v646, 0.0
          %v651 = vsel %vm627, %v647, 0.0
          %v652 = vsel %vm351, %v648, 0.0
          %v653 = vsel %vm351, %v649, 0.0
          %v654 = vadd.f32 %v652, %v653
          %v655 = vsel %vm351, %v650, 0.0
          %v656 = vadd.f32 %v654, %v655
          %v657 = vsel %vm351, %v651, 0.0
          %v658 = vadd.f32 %v656, %v657
          %659 = vadd.xlane.f32.xlu0 %v658
          %v660 = vpop.xlane.xlu0 %659
          %v661 = vrot.slane %v660, 4
          %v662 = vadd.f32 %v660, %v661
          %v663 = vrot.slane %v662, 2
          %v664 = vadd.f32 %v662, %v663
          %v665 = vrot.slane %v664, 1
          %v666 = vadd.f32 %v664, %v665
          %s667 = vtos %v666
          %v668 = vsel %vm624, 1, 0
          %v669 = vsel %vm625, 1, 0
          %v670 = vsel %vm626, 1, 0
          %v671 = vsel %vm627, 1, 0
          %v672 = vcvt.s32.f32 %v668
          %v673 = vcvt.s32.f32 %v669
          %v674 = vcvt.s32.f32 %v670
          %v675 = vcvt.s32.f32 %v671
          %v676 = vsel %vm351, %v672, 0.0
          %v677 = vsel %vm351, %v673, 0.0
          %v678 = vadd.f32 %v676, %v677
          %v679 = vsel %vm351, %v674, 0.0
          %v680 = vadd.f32 %v678, %v679
          %v681 = vsel %vm351, %v675, 0.0
          %v682 = vadd.f32 %v680, %v681
          %683 = vadd.xlane.f32.xlu0 %v682
          %v684 = vpop.xlane.xlu0 %683
          %v685 = vrot.slane %v684, 4
          %v686 = vadd.f32 %v684, %v685
          %v687 = vrot.slane %v686, 2
          %v688 = vadd.f32 %v686, %v687
          %v689 = vrot.slane %v688, 1
          %v690 = vadd.f32 %v688, %v689
          %s691 = vtos %v690
          %v692 = vsub.s32 %v309, %v468
          %vm693 = vcmp.eq.s32.totalorder %v692, 0
          %vm694 = vcmp.ge.s32.totalorder %v692, 4294967292
          %vm695 = vcmp.le.s32.totalorder %v692, 4294967295
          %vm696 = vmand %vm694, %vm695
          %v697 = vld [vmem:[#allocation3] sm:$0xff]
          %v698 = vld [vmem:[%s276] sm:$0x1]
          %v699 = vld [vmem:[%s280] sm:$0xff]
          %v700 = vsel %vm693, %v697, 0.0
          %v701 = vsel %vm586, %v700, 0.0
          %702 = vadd.xlane.f32.xlu0 %v701
          %v703 = vpop.xlane.xlu0 %702
          %vm704 = vcmp.ne.s32.totalorder %v698, 0
          %v705 = vsel %vm704, 1, 0
          %v706 = vlaneseq
          %v707 = vshrl.u32 %v706, 7
          %v708 = vsub.s32 0, %v707
          %v709 = vrot.slane %v705, %v708
          %vm710 = vcmp.eq.s32.totalorder %v709, 1
          %vm711 = vmand %vm696, %vm710
          %v712 = vlaneseq
          %v713 = vshrl.u32 %v712, 7
          %v714 = vsub.s32 0, %v713
          %v715 = vrot.slane %v698, %v714
          %716 = vset.pattern.permute.xlu0 0
          %717 = vperm.xlu0 %716, %v699
          %v718 = vpop.permute.xlu0 %717
          %vm719 = vcmp.ne.s32.totalorder %v715, %v718
          %vm720 = vmand %vm711, %vm719
          %v721 = vsub.f32 %v697, %v703
          %v722 = vmul.f32 %v721, 1.442695
          %v723 = vpow.pop %v722
          %v724 = vsel %vm720, %v723, 0.0
          %v725 = vsel %vm586, %v724, 0.0
          %726 = vadd.xlane.f32.xlu0 %v725
          %v727 = vpop.xlane.xlu0 %726
          %vm728 = vcmp.ne.s32.totalorder %v699, 0
          %v729 = vadd.f32 %v727, 1.0
          %v730 = vlog2.pop %v729
          %v731 = vmul.f32 %v730, 0.6931472
          %v732 = vsel %vm728, %v731, 0.0
          %v733 = vsel %vm351, %v732, 0.0
          %734 = vadd.xlane.f32.xlu0 %v733
          %v735 = vpop.xlane.xlu0 %734
          %v736 = vrot.slane %v735, 4
          %v737 = vadd.f32 %v735, %v736
          %v738 = vrot.slane %v737, 2
          %v739 = vadd.f32 %v737, %v738
          %v740 = vrot.slane %v739, 1
          %v741 = vadd.f32 %v739, %v740
          %s742 = vtos %v741
          %s743 = sadd.f32 %s742, 0.0
          %v744 = vsel %vm728, 1, 0
          %v745 = vcvt.s32.f32 %v744
          %v746 = vsel %vm351, %v745, 0.0
          %747 = vadd.xlane.f32.xlu0 %v746
          %v748 = vpop.xlane.xlu0 %747
          %v749 = vrot.slane %v748, 4
          %v750 = vadd.f32 %v748, %v749
          %v751 = vrot.slane %v750, 2
          %v752 = vadd.f32 %v750, %v751
          %v753 = vrot.slane %v752, 1
          %v754 = vadd.f32 %v752, %v753
          %s755 = vtos %v754
          %s756 = sadd.f32 %s755, 0.0
          %vm757 = vcmp.eq.s32.totalorder %v309, 0
          %v758 = vstv %s667
          %v759 = vsel %vm757, %v758, 0.0
          %vm760 = vcmp.eq.s32.totalorder %v309, 1
          %v761 = vstv %s691
          %v762 = vsel %vm760, %v761, 0.0
          %v763 = vadd.f32 %v759, %v762
          %vm764 = vcmp.eq.s32.totalorder %v309, 2
          %v765 = vstv %s743
          %v766 = vsel %vm764, %v765, 0.0
          %v767 = vadd.f32 %v763, %v766
          %vm768 = vcmp.eq.s32.totalorder %v309, 3
          %v769 = vstv %s756
          %v770 = vsel %vm768, %v769, 0.0
          %v771 = vadd.f32 %v767, %v770
          %772 = vst [vmem:[%s268] sm:$0x1] %v771
        $region48: #{tpu_custom_call.1} parent=35 // pred_fallthru
          _
        %s773 = sand.u32 %s147, 1
        %s774 = scalar_lea.sflag [#allocation6], %s773
        %s775 = sand.u32 %s147, 1
        %s776 = scalar_lea.vmem [#allocation7], %s775
        // Predicated region
        $region49: #{tpu_custom_call.1} parent=35 // pred_check
          %p777 = pneg %p157
        $region50: #{tpu_custom_call.1} parent=35 // pred_check_branch
          %779 = sbr.rel (%p777) target = $region52
        $region51: #{tpu_custom_call.1} parent=35 // pred_region
          %s781 = ssub.s32 16, 16
          %782 = vsyncadd %s774, %s781
          %s783 = smul.addr %s25, 16
          %s784 = scalar_lea.hbm %s4, %s783
          %s786 = sshll.u32 %s776, 4
          %s787 = int_to_ptr.vmem [resolvable:$true] %s786
          %789 = dma.vmem_to_hbm [thread:$0]  %s787, 16, %s784, %s774
        $region52: #{tpu_custom_call.1} parent=35 // pred_fallthru
          _
      $region36: #{tpu_custom_call.1} parent=5 // pred_fallthru
        _
      %p790 = scmp.le.s32.totalorder 2, %s16
      // Predicated region
      $region53: #{tpu_custom_call.1} parent=5 // pred_check
        %p791 = pneg %p790
      $region54: #{tpu_custom_call.1} parent=5 // pred_check_branch
        %793 = sbr.rel (%p791) target = $region56
      $region55: #{tpu_custom_call.1} parent=5 // pred_region
        %s794 = ssub.s32 %s16, 2
        // Predicated region
        $region57: #{tpu_custom_call.1} parent=55 // pred_check
          %p795 = pneg %p163
        $region58: #{tpu_custom_call.1} parent=55 // pred_check_branch
          %797 = sbr.rel (%p795) target = $region60
        $region59: #{tpu_custom_call.1} parent=55 // pred_region
          %s798 = sand.u32 %s148, 1
          %s799 = scalar_lea.sflag [#allocation6], %s798
          %s800 = sand.u32 %s148, 1
          %s801 = scalar_lea.vmem [#allocation7], %s800
          %802 = dma.done %s799, 16
        $region60: #{tpu_custom_call.1} parent=55 // pred_fallthru
          _
      $region56: #{tpu_custom_call.1} parent=5 // pred_fallthru
        _
    $region6: #{tpu_custom_call.1} parent=1 // loop_footer
      %s20 = sadd.s32 1, %s16
    $region7: #{tpu_custom_call.1} parent=1 // loop_footer_branch
      %15 = sbr.rel target = $region3
    $region8: #{tpu_custom_call.1} parent=1 // loop_exit
      _
    %803 = vsyncpa [#allocation5], 1
    %s804 = scalar_lea.sflag [#allocation5], 1
    %805 = vsyncpa %s804, 1
    %806 = vsyncpa [#allocation6], 1
    %s807 = scalar_lea.sflag [#allocation6], 1
    %808 = vsyncpa %s807, 1

</llo_original>
